<compile_context>
chip_gen: v6e
topology: v6e:2x2x1
jax: 0.10.0
libtpu: 0.0.40
codegen_flags: <defaults>
</compile_context>

<pallas_src>
import functools

import jax
import jax.numpy as jnp
from jax.experimental import pallas as pl
from jax.experimental.pallas import tpu as pltpu


def _round_up(x, m):
    return ((x + m - 1) // m) * m


def _tpu_vmem_capacity_bytes():
    """Physical per-core VMEM (generation-aware); conservative fallback."""
    try:
        cap = getattr(pltpu.get_tpu_info(), "vmem_capacity_bytes", None)
        if cap:
            return int(cap)
    except Exception:
        pass
    return 64 * 1024 * 1024   # v7x per-TensorCore VMEM (smallest of v5e/v6e/v7x)


def _pick_batch_tile(batch, cap):
    """Largest multiple of 8 <= cap that divides `batch` (dense tiles, no obs
    copy and no ragged tile); otherwise the cap itself (ragged last tile whose
    overhang rows are sliced away by the wrapper)."""
    cap = max(8, (cap // 8) * 8)
    for t in range(cap, 7, -8):
        if batch % t == 0:
            return t
    return cap


def _pick_seq_tile(seq_len, max_tile, mult):
    """Largest divisor of seq_len that is <= max_tile and a multiple of `mult`
    (sublane packing of the matmul dtype); falls back to the full sequence
    (block == full dim is always a legal block shape)."""
    if seq_len <= max_tile:
        return seq_len
    best = None
    for t in range(mult, min(max_tile, seq_len) + 1, mult):
        if seq_len % t == 0:
            best = t
    if best is None:
        # TODO(synk): sequences with no aligned divisor (e.g. large primes) fall
        # back to TS == S; in-kernel masking of a ragged last token tile would
        # remove this large-tile path.  The wrapper's TB-shrinking guard below
        # bounds VMEM in that case.
        return seq_len
    return best


def _pick_token_chunk(ts, per_token_bytes, target_bytes):
    """Divisor of `ts` that is a multiple of 16 (bf16 sublane packing) keeping
    the live encoder intermediate under ~target_bytes; largest fitting divisor,
    else the smallest legal one; full ts for short / odd sequences."""
    if ts % 16 != 0:
        return ts
    divisors = [c for c in range(16, ts + 1, 16) if ts % c == 0]
    fitting = [c for c in divisors if c * per_token_bytes <= target_bytes]
    return max(fitting) if fitting else min(divisors)


def _rllib_kernel(obs_ref, w_enc_ref, b_enc_ref, w_heads_ref, b_heads_ref,
                  out_ref, acc_ref, *, token_chunk):
    TB, TS, D = obs_ref.shape
    H = w_enc_ref.shape[1]                      # == H_pad (multiple of 128)
    s = pl.program_id(1)

    @pl.when(s == 0)
    def _():
        acc_ref[...] = jnp.zeros_like(acc_ref)

    def encode(start, size):
        # (TB, size, D) -> (TB*size, D): `size` is a multiple of the sublane
        # packing (or the full token dim), so the merge is layout-preserving.
        x = obs_ref[:, pl.ds(start, size), :].reshape(TB * size, D)
        h = jnp.dot(x, w_enc_ref[...], preferred_element_type=jnp.float32)
        h = jnp.maximum(h + b_enc_ref[...], 0.0)            # bias + ReLU in f32 (VPU)
        acc_ref[...] += jnp.sum(h.reshape(TB, size, H), axis=1)

    if token_chunk >= TS:
        encode(0, TS)
    else:
        # Chunk the encoder over tokens so the live (TB*chunk, H) f32
        # intermediate stays a few MiB, independent of the big obs DMA tile.
        @pl.loop(0, TS // token_chunk)
        def _(c):
            encode(pl.multiple_of(c * token_chunk, token_chunk), token_chunk)

    # Last token tile: fused pi|vf head.  1/S is folded into w_heads; the head
    # matmul stays f32 (negligible FLOPs, keeps the value column full precision).
    # A_pad is a multiple of 128 -> unmasked lane-dense store.
    @pl.when(s == pl.num_programs(1) - 1)
    def _():
        fused = jnp.dot(acc_ref[...], w_heads_ref[...],
                        preferred_element_type=jnp.float32)
        out_ref[...] = (fused + b_heads_ref[...]).astype(out_ref.dtype)


def rllib_wrapper_forward(obs, params, *, matmul_dtype=jnp.bfloat16,
                          batch_tile=128, seq_tile=None, token_chunk=None):
    """Forward pass of RLlibWrapper (non-recurrent path).

    Returns (action_logits, value, output_state) matching
    RLlibWrapper.forward(...) + value_function(); output_state is []."""
    B, S, D = obs.shape
    H = params["w_enc"].shape[1]
    A = params["w_pi"].shape[1]

    mm_bytes = jnp.dtype(matmul_dtype).itemsize
    sub_mult = max(8, 32 // mm_bytes)           # sublane packing: 8 f32 / 16 bf16

    # ---- lane-dense parameter prep -------------------------------------------
    H_pad = _round_up(H, 128)                   # dense encoder-N / head-K / acc
    A_pad = _round_up(A + 1, 128)               # fused pi|vf output lanes

    w_enc = jnp.zeros((D, H_pad), jnp.float32).at[:, :H].set(
        params["w_enc"].astype(jnp.float32))
    b_enc = jnp.zeros((1, H_pad), jnp.float32).at[:, :H].set(
        params["b_enc"].astype(jnp.float32))

    w_heads = jnp.zeros((H_pad, A_pad), jnp.float32)
    w_heads = w_heads.at[:H, :A].set(params["w_pi"].astype(jnp.float32))
    w_heads = w_heads.at[:H, A].set(params["w_vf"][:, 0].astype(jnp.float32))
    w_heads = w_heads * jnp.float32(1.0 / S)    # fold the token mean into the head
    b_heads = jnp.zeros((1, A_pad), jnp.float32)
    b_heads = b_heads.at[:, :A].set(params["b_pi"].astype(jnp.float32))
    b_heads = b_heads.at[:, A].set(params["b_vf"][0, 0].astype(jnp.float32))

    obs_c = obs.astype(matmul_dtype)            # bf16 default halves the obs DMA
    w_enc_c = w_enc.astype(matmul_dtype)        # heads stay f32 (value precision)

    # ---- generation-aware tiling / VMEM budget --------------------------------
    vmem_cap = _tpu_vmem_capacity_bytes()
    budget = int(vmem_cap * 0.70)               # headroom for Mosaic internals
    chunk_target = 4 << 20                      # live encoder-intermediate cap

    # Weights/biases are resident but still double-buffered by the pipeline, so
    # count them twice in the budget.
    weight_bytes = 2 * (D * H_pad * mm_bytes + H_pad * 4
                        + H_pad * A_pad * 4 + A_pad * 4)

    if B < 8:
        # Tiny batches: pad to one 8-row tile (copy cost is at most 8 rows).
        TB = 8
        obs_c = jnp.pad(obs_c, ((0, 8 - B), (0, 0), (0, 0)))
        n_rows = 8
    else:
        # No obs copy: TB preferably divides B; otherwise the last batch tile is
        # ragged and its overhang rows hold unspecified data — safe only because
        # every batch row is computed independently and out[:B] slices them off.
        tb_cap = min(_round_up(batch_tile, 8), (B // 8) * 8)
        if B >= 16:
            # Keep >= 2 parallel batch tiles so both v7x TensorCores get work.
            tb_cap = min(tb_cap, _round_up((B + 1) // 2, 8))
        TB = _pick_batch_tile(B, tb_cap)
        n_rows = B

    while True:
        fixed = weight_bytes + 2 * TB * A_pad * 4 + TB * H_pad * 4   # out(x2) + acc
        obs_budget = budget - fixed - 2 * chunk_target
        ts_cap = max(sub_mult, obs_budget // (2 * TB * D * mm_bytes))
        if seq_tile is not None:
            ts_cap = min(ts_cap, seq_tile)
        TS = _pick_seq_tile(S, ts_cap, sub_mult)
        total = fixed + 2 * TB * TS * D * mm_bytes + 2 * chunk_target
        if total <= budget or TB <= 8:
            break
        TB = _pick_batch_tile(max(B, 8), max(8, TB // 2))   # guard: shrink TB

    if token_chunk is None:
        per_tok = TB * (D * mm_bytes + 2 * H_pad * 4)       # x slice + h (+copy)
        token_chunk = _pick_token_chunk(TS, per_tok, chunk_target)
    elif TS % token_chunk != 0 or token_chunk % sub_mult != 0:
        token_chunk = TS

    grid_b = (n_rows + TB - 1) // TB
    grid = (grid_b, S // TS)

    kernel = functools.partial(_rllib_kernel, token_chunk=token_chunk)

    cost = pl.CostEstimate(
        flops=2 * B * S * D * H_pad + 2 * B * H_pad * A_pad,
        transcendentals=0,
        bytes_accessed=(B * S * D * mm_bytes + grid_b * TB * A_pad * 4
                        + weight_bytes // 2),
    )

    out = pl.pallas_call(
        kernel,
        out_shape=jax.ShapeDtypeStruct((grid_b * TB, A_pad), jnp.float32),
        grid_spec=pltpu.PrefetchScalarGridSpec(
            num_scalar_prefetch=0,
            grid=grid,
            in_specs=[
                # obs: the only large, pipelined input (double-buffered DMA)
                pl.BlockSpec((TB, TS, D), lambda i, s: (i, s, 0)),
                # weights / biases: resident in VMEM across the whole grid
                pl.BlockSpec((D, H_pad), lambda i, s: (0, 0)),
                pl.BlockSpec((1, H_pad), lambda i, s: (0, 0)),
                pl.BlockSpec((H_pad, A_pad), lambda i, s: (0, 0)),
                pl.BlockSpec((1, A_pad), lambda i, s: (0, 0)),
            ],
            out_specs=pl.BlockSpec((TB, A_pad), lambda i, s: (i, 0)),
            scratch_shapes=[pltpu.VMEM((TB, H_pad), jnp.float32)],   # pooled sum
        ),
        compiler_params=pltpu.CompilerParams(
            dimension_semantics=("parallel", "arbitrary"),
            vmem_limit_bytes=int(min(0.9 * vmem_cap,
                                     max(32 << 20, total + (16 << 20)))),
        ),
        cost_estimate=cost,
    )(obs_c, w_enc_c, b_enc, w_heads, b_heads)

    logits = out[:B, :A]          # slice away batch overhang + lane padding
    value = out[:B, A]            # RLlib value_function() -> [B]
    return logits, value, []      # output_state == [] (non-recurrent path)


def init_params(key, dim_token, hidden, num_outputs):
    ks = jax.random.split(key, 3)
    scale = lambda fan_in: 1.0 / jnp.sqrt(jnp.float32(fan_in))
    return {
        "w_enc": jax.random.normal(ks[0], (dim_token, hidden), jnp.float32) * scale(dim_token),
        "b_enc": jnp.zeros((1, hidden), jnp.float32),
        "w_pi":  jax.random.normal(ks[1], (hidden, num_outputs), jnp.float32) * scale(hidden),
        "b_pi":  jnp.zeros((1, num_outputs), jnp.float32),
        "w_vf":  jax.random.normal(ks[2], (hidden, 1), jnp.float32) * scale(hidden),
        "b_vf":  jnp.zeros((1, 1), jnp.float32),
    }


def reference_forward(obs, p):
    h = jnp.maximum(jnp.einsum("bsd,dh->bsh", obs, p["w_enc"]) + p["b_enc"][0], 0.0)
    pooled = h.mean(axis=1)
    logits = pooled @ p["w_pi"] + p["b_pi"][0]
    value = (pooled @ p["w_vf"] + p["b_vf"][0])[:, 0]
    return logits, value


if __name__ == "__main__":
    D, H, A = 32, 32, 4           # dim_token, hidden, num_outputs (dim_action)

    key = jax.random.PRNGKey(0)
    k_obs, k_par = jax.random.split(key)
    params = init_params(k_par, D, H, A)

    # Case 1: tiny batch (pad path). f32 operands -> strict check; default bf16
    # operands (halved obs DMA, f32 accumulation, f32 head) -> loose check.
    B, S = 2, 8
    obs = jax.random.normal(k_obs, (B, S, D), jnp.float32)
    ref_logits, ref_value = reference_forward(obs, params)

    logits, value, state = rllib_wrapper_forward(obs, params, matmul_dtype=jnp.float32)
    jax.block_until_ready((logits, value))
    assert logits.shape == (B, A) and value.shape == (B,) and state == []
    assert jnp.allclose(logits, ref_logits, atol=1e-5, rtol=1e-5)
    assert jnp.allclose(value, ref_value, atol=1e-5, rtol=1e-5)

    logits_bf, value_bf, _ = rllib_wrapper_forward(obs, params)      # bf16 default
    jax.block_until_ready((logits_bf, value_bf))
    assert jnp.allclose(logits_bf, ref_logits, atol=5e-2, rtol=5e-2)
    assert jnp.allclose(value_bf, ref_value, atol=5e-2, rtol=5e-2)

    # Case 2: multiple batch tiles (TB divides B -> no obs copy) and multiple
    # token tiles (grid-axis accumulator); f32 strict.
    B2, S2 = 24, 16
    obs2 = jax.random.normal(jax.random.PRNGKey(1), (B2, S2, D), jnp.float32)
    logits2, value2, _ = rllib_wrapper_forward(obs2, params, matmul_dtype=jnp.float32,
                                               batch_tile=8, seq_tile=8)
    jax.block_until_ready((logits2, value2))
    ref_logits2, ref_value2 = reference_forward(obs2, params)
    assert jnp.allclose(logits2, ref_logits2, atol=1e-5, rtol=1e-5)
    assert jnp.allclose(value2, ref_value2, atol=1e-5, rtol=1e-5)

    # Case 3: in-kernel token chunking (pl.loop over 16-token sub-chunks inside
    # a single big obs tile) plus >=2 batch tiles; f32 strict.
    B3, S3 = 16, 64
    obs3 = jax.random.normal(jax.random.PRNGKey(2), (B3, S3, D), jnp.float32)
    logits3, value3, _ = rllib_wrapper_forward(obs3, params, matmul_dtype=jnp.float32,
                                               token_chunk=16)
    jax.block_until_ready((logits3, value3))
    ref_logits3, ref_value3 = reference_forward(obs3, params)
    assert jnp.allclose(logits3, ref_logits3, atol=1e-5, rtol=1e-5)
    assert jnp.allclose(value3, ref_value3, atol=1e-5, rtol=1e-5)

    # TODO(synk): recurrent state handling (set_recurrent_state / get_output_state)
    # raises NotImplementedError in the reference module; only the non-recurrent
    # path is implemented here.
    print("KERNEL_OK")
</pallas_src>

<mosaic_0001>
module attributes {stable_mosaic.version = 11 : i64} {
  func.func @_rllib_kernel(%arg0: i32, %arg1: i32, %arg2: memref<8x8x32xf32, #tpu.memory_space<vmem>>, %arg3: memref<32x128xf32, #tpu.memory_space<vmem>>, %arg4: memref<1x128xf32, #tpu.memory_space<vmem>>, %arg5: memref<128x128xf32, #tpu.memory_space<vmem>>, %arg6: memref<1x128xf32, #tpu.memory_space<vmem>>, %arg7: memref<8x128xf32, #tpu.memory_space<vmem>>, %arg8: memref<8x128xf32, #tpu.memory_space<vmem>>) attributes {dimension_semantics = [#tpu.dimension_semantics<parallel>, #tpu.dimension_semantics<arbitrary>], iteration_bounds = array<i64: 1, 1>, scalar_prefetch = 0 : i64, scratch_operands = 1 : i64, tpu.core_type = #tpu.core_type<tc>, window_params = [{transform_indices = @transform_0, window_bounds = array<i64: 8, 8, 32>}, {pipeline_mode = #tpu.pipeline_mode<synchronous>, transform_indices = @transform_1, window_bounds = array<i64: 32, 128>}, {pipeline_mode = #tpu.pipeline_mode<synchronous>, transform_indices = @transform_2, window_bounds = array<i64: 1, 128>}, {pipeline_mode = #tpu.pipeline_mode<synchronous>, transform_indices = @transform_3, window_bounds = array<i64: 128, 128>}, {pipeline_mode = #tpu.pipeline_mode<synchronous>, transform_indices = @transform_4, window_bounds = array<i64: 1, 128>}, {transform_indices = @transform_5, window_bounds = array<i64: 8, 128>}]} {
    %c0_i32 = arith.constant 0 : i32
    %0 = arith.cmpi eq, %arg1, %c0_i32 : i32
    %1 = arith.extui %0 : i1 to i32
    %c0_i32_0 = arith.constant 0 : i32
    %2 = arith.cmpi ne, %1, %c0_i32_0 : i32
    scf.if %2 {
      %cst_15 = arith.constant 0.000000e+00 : f32
      %20 = vector.broadcast %cst_15 : f32 to vector<8x128xf32>
      %c0_16 = arith.constant 0 : index
      %c0_17 = arith.constant 0 : index
      %21 = vector.load %arg8[%c0_16, %c0_17] : memref<8x128xf32, #tpu.memory_space<vmem>>, vector<8x128xf32>
      tpu.vector_store %arg8[%c0_16, %c0_17], %20 {strides = array<i32>} : memref<8x128xf32, #tpu.memory_space<vmem>>, vector<8x128xf32>,
    } else {
    }
    %c0 = arith.constant 0 : index
    %c0_1 = arith.constant 0 : index
    %c0_2 = arith.constant 0 : index
    %3 = vector.load %arg2[%c0, %c0_1, %c0_2] : memref<8x8x32xf32, #tpu.memory_space<vmem>>, vector<8x8x32xf32>
    %4 = vector.shape_cast %3 : vector<8x8x32xf32> to vector<64x32xf32>
    %c0_3 = arith.constant 0 : index
    %c0_4 = arith.constant 0 : index
    %5 = vector.load %arg3[%c0_3, %c0_4] : memref<32x128xf32, #tpu.memory_space<vmem>>, vector<32x128xf32>
    %cst = arith.constant dense<0.000000e+00> : vector<64x128xf32>
    %6 = tpu.matmul %4, %5, %cst {dimension_numbers = #tpu.dot_dimension_numbers<[1], [0], [0], [1], [0, 0, 1, 1], [], []>} : vector<64x32xf32>, vector<32x128xf32>, vector<64x128xf32> -> vector<64x128xf32>
    %c0_5 = arith.constant 0 : index
    %c0_6 = arith.constant 0 : index
    %7 = vector.load %arg4[%c0_5, %c0_6] : memref<1x128xf32, #tpu.memory_space<vmem>>, vector<1x128xf32>
    %8 = vector.broadcast %7 : vector<1x128xf32> to vector<64x128xf32>
    %9 = arith.addf %6, %8 : vector<64x128xf32>
    %cst_7 = arith.constant 0.000000e+00 : f32
    %10 = vector.broadcast %cst_7 : f32 to vector<64x128xf32>
    %11 = arith.maximumf %9, %10 : vector<64x128xf32>
    %c0_8 = arith.constant 0 : index
    %c0_9 = arith.constant 0 : index
    %12 = vector.load %arg8[%c0_8, %c0_9] : memref<8x128xf32, #tpu.memory_space<vmem>>, vector<8x128xf32>
    %13 = vector.shape_cast %11 : vector<64x128xf32> to vector<8x8x128xf32>
    %cst_10 = arith.constant dense<0.000000e+00> : vector<8x128xf32>
    %14 = vector.multi_reduction <add>, %13, %cst_10 [1] : vector<8x8x128xf32> to vector<8x128xf32>
    %15 = arith.addf %12, %14 : vector<8x128xf32>
    %c0_11 = arith.constant 0 : index
    %c0_12 = arith.constant 0 : index
    %16 = vector.load %arg8[%c0_11, %c0_12] : memref<8x128xf32, #tpu.memory_space<vmem>>, vector<8x128xf32>
    tpu.vector_store %arg8[%c0_11, %c0_12], %15 {strides = array<i32>} : memref<8x128xf32, #tpu.memory_space<vmem>>, vector<8x128xf32>,
    %c0_i32_13 = arith.constant 0 : i32
    %17 = arith.cmpi eq, %arg1, %c0_i32_13 : i32
    %18 = arith.extui %17 : i1 to i32
    %c0_i32_14 = arith.constant 0 : i32
    %19 = arith.cmpi ne, %18, %c0_i32_14 : i32
    scf.if %19 {
      %c0_15 = arith.constant 0 : index
      %c0_16 = arith.constant 0 : index
      %20 = vector.load %arg8[%c0_15, %c0_16] : memref<8x128xf32, #tpu.memory_space<vmem>>, vector<8x128xf32>
      %c0_17 = arith.constant 0 : index
      %c0_18 = arith.constant 0 : index
      %21 = vector.load %arg5[%c0_17, %c0_18] : memref<128x128xf32, #tpu.memory_space<vmem>>, vector<128x128xf32>
      %cst_19 = arith.constant dense<0.000000e+00> : vector<8x128xf32>
      %22 = tpu.matmul %20, %21, %cst_19 {dimension_numbers = #tpu.dot_dimension_numbers<[1], [0], [0], [1], [0, 0, 1, 1], [], []>} : vector<8x128xf32>, vector<128x128xf32>, vector<8x128xf32> -> vector<8x128xf32>
      %c0_20 = arith.constant 0 : index
      %c0_21 = arith.constant 0 : index
      %23 = vector.load %arg6[%c0_20, %c0_21] : memref<1x128xf32, #tpu.memory_space<vmem>>, vector<1x128xf32>
      %24 = vector.broadcast %23 : vector<1x128xf32> to vector<8x128xf32>
      %25 = arith.addf %22, %24 : vector<8x128xf32>
      %c0_22 = arith.constant 0 : index
      %c0_23 = arith.constant 0 : index
      %26 = vector.load %arg7[%c0_22, %c0_23] : memref<8x128xf32, #tpu.memory_space<vmem>>, vector<8x128xf32>
      tpu.vector_store %arg7[%c0_22, %c0_23], %25 {strides = array<i32>} : memref<8x128xf32, #tpu.memory_space<vmem>>, vector<8x128xf32>,
    } else {
    }
    return
  }
  func.func @transform_0(%arg0: i32, %arg1: i32) -> (i32, i32, i32) {
    %c0_i32 = arith.constant 0 : i32
    %c0_i32_0 = arith.constant 0 : i32
    return %arg0, %arg1, %c0_i32 : i32, i32, i32
  }
  func.func @transform_1(%arg0: i32, %arg1: i32) -> (i32, i32) {
    %c0_i32 = arith.constant 0 : i32
    %c0_i32_0 = arith.constant 0 : i32
    %c0_i32_1 = arith.constant 0 : i32
    return %c0_i32, %c0_i32_0 : i32, i32
  }
  func.func @transform_2(%arg0: i32, %arg1: i32) -> (i32, i32) {
    %c0_i32 = arith.constant 0 : i32
    %c0_i32_0 = arith.constant 0 : i32
    %c0_i32_1 = arith.constant 0 : i32
    return %c0_i32, %c0_i32_0 : i32, i32
  }
  func.func @transform_3(%arg0: i32, %arg1: i32) -> (i32, i32) {
    %c0_i32 = arith.constant 0 : i32
    %c0_i32_0 = arith.constant 0 : i32
    %c0_i32_1 = arith.constant 0 : i32
    return %c0_i32, %c0_i32_0 : i32, i32
  }
  func.func @transform_4(%arg0: i32, %arg1: i32) -> (i32, i32) {
    %c0_i32 = arith.constant 0 : i32
    %c0_i32_0 = arith.constant 0 : i32
    %c0_i32_1 = arith.constant 0 : i32
    return %c0_i32, %c0_i32_0 : i32, i32
  }
  func.func @transform_5(%arg0: i32, %arg1: i32) -> (i32, i32) {
    %c0_i32 = arith.constant 0 : i32
    %c0_i32_0 = arith.constant 0 : i32
    return %arg0, %c0_i32 : i32, i32
  }
}

</mosaic_0001>

<llo_original>
// kernel: tpu_custom_call.1
$region0: #{tpu_custom_call.1}
  #allocation0 [shape = 'u32[]', space=smem, size = 0x4, offset = 0x4, fixed_abs, tag = 'smem constant byte address 0x4 - core index']
  #allocation1 [shape = 'u32[144,128]{1,0:T(1,128)}', space=vmem, size = 0x12000, scoped, tag = 'internal scratch']
  #allocation2 [shape = 'f32[8,128]{1,0:T(8,128)}', space=vmem, size = 0x1000, scoped, tag = 'scratch operand']
  %s0 = inlined_call_operand.hbm [shape: f32[8,8,32], index: 0, kind: input, shape index: {}]
  %s1 = inlined_call_operand.hbm [shape: f32[32,128], index: 1, kind: input, shape index: {}]
  %s2 = inlined_call_operand.vmem [shape: f32[1,128], index: 2, kind: input, shape index: {}]
  %s3 = inlined_call_operand.hbm [shape: f32[128,128], index: 3, kind: input, shape index: {}]
  %s4 = inlined_call_operand.vmem [shape: f32[1,128], index: 4, kind: input, shape index: {}]
  %s5 = inlined_call_operand.hbm [shape: f32[8,128], index: 5, kind: output, shape index: {}]
  %s6 = sld [smem:[#allocation0]]
  $region50: #{tpu_custom_call.1} parent=0
    _
  %s8 = ssub.s32 1, %s6
  %s9 = scalar_select 0, %s8, %s6
  $region1: #{tpu_custom_call.1} parent=0
    #allocation3 [shape = 'u8[32768]{0}', space=vmem, size = 0x8000, scoped, tag = 'input window, operand 0, single buffered']
    #allocation4 [shape = 's32[1]{0}', space=sflag, size = 0x4, scoped, tag = 'scoped memory for tpu_custom_call.1']
    #allocation5 [shape = 's32[1]{0}', space=sflag, size = 0x4, scoped, tag = 'scoped memory for tpu_custom_call.1']
    #allocation6 [shape = 'u8[16384]{0}', space=vmem, size = 0x4000, scoped, tag = 'input window, operand 1, single buffered']
    #allocation7 [shape = 's32[1]{0}', space=sflag, size = 0x4, scoped, tag = 'scoped memory for tpu_custom_call.1']
    #allocation8 [shape = 'u8[65536]{0}', space=vmem, size = 0x10000, scoped, tag = 'input window, operand 3, single buffered']
    #allocation9 [shape = 'u8[4096]{0}', space=vmem, size = 0x1000, scoped, tag = 'output window, operand 0, single buffered']
    %10 = vsyncpa [#allocation4], 0
    %11 = vsyncpa [#allocation7], 0
    %12 = vsyncpa [#allocation5], 0
    // Predicated region
    $region2: #{tpu_custom_call.1} parent=1 // pred_check
      _
    $region3: #{tpu_custom_call.1} parent=1 // pred_check_branch
      %14 = sbr.rel (0) target = $region5
    $region4: #{tpu_custom_call.1} parent=1 // pred_region
      %s16 = ssub.s32 1024, 1024
      %17 = vsyncadd [#allocation4], %s16
      %s18 = sshll.u32 [#allocation3], 4
      %s19 = int_to_ptr.vmem [resolvable:$true] %s18
      %24 = dma.hbm_to_vmem [thread:$0]  %s0, 1024, %s19, [#allocation4], 128, 128, 8
    $region5: #{tpu_custom_call.1} parent=1 // pred_fallthru
      _
    // Predicated region
    $region6: #{tpu_custom_call.1} parent=1 // pred_check
      _
    $region7: #{tpu_custom_call.1} parent=1 // pred_check_branch
      %26 = sbr.rel (0) target = $region9
    $region8: #{tpu_custom_call.1} parent=1 // pred_region
      %s28 = ssub.s32 512, 512
      %29 = vsyncadd [#allocation7], %s28
      %s30 = sshll.u32 [#allocation6], 4
      %s31 = int_to_ptr.vmem [resolvable:$true] %s30
      %36 = dma.hbm_to_vmem [thread:$0]  %s1, 512, %s31, [#allocation7], 128, 128, 8
    $region9: #{tpu_custom_call.1} parent=1 // pred_fallthru
      _
    // Predicated region
    $region10: #{tpu_custom_call.1} parent=1 // pred_check
      _
    $region11: #{tpu_custom_call.1} parent=1 // pred_check_branch
      %38 = sbr.rel (0) target = $region13
    $region12: #{tpu_custom_call.1} parent=1 // pred_region
      _
    $region13: #{tpu_custom_call.1} parent=1 // pred_fallthru
      _
    // Predicated region
    $region14: #{tpu_custom_call.1} parent=1 // pred_check
      _
    $region15: #{tpu_custom_call.1} parent=1 // pred_check_branch
      %40 = sbr.rel (0) target = $region17
    $region16: #{tpu_custom_call.1} parent=1 // pred_region
      %s42 = ssub.s32 2048, 2048
      %43 = vsyncadd [#allocation7], %s42
      %s44 = sshll.u32 [#allocation8], 4
      %s45 = int_to_ptr.vmem [resolvable:$true] %s44
      %50 = dma.hbm_to_vmem [thread:$0]  %s3, 2048, %s45, [#allocation7], 128, 128, 8
    $region17: #{tpu_custom_call.1} parent=1 // pred_fallthru
      _
    // Predicated region
    $region18: #{tpu_custom_call.1} parent=1 // pred_check
      _
    $region19: #{tpu_custom_call.1} parent=1 // pred_check_branch
      %52 = sbr.rel (0) target = $region21
    $region20: #{tpu_custom_call.1} parent=1 // pred_region
      _
    $region21: #{tpu_custom_call.1} parent=1 // pred_fallthru
      _
    // Predicated region
    $region22: #{tpu_custom_call.1} parent=1 // pred_check
      _
    $region23: #{tpu_custom_call.1} parent=1 // pred_check_branch
      %54 = sbr.rel (0) target = $region25
    $region24: #{tpu_custom_call.1} parent=1 // pred_region
      %55 = dma.done [#allocation4], 1024
    $region25: #{tpu_custom_call.1} parent=1 // pred_fallthru
      _
    // Predicated region
    $region26: #{tpu_custom_call.1} parent=1 // pred_check
      _
    $region27: #{tpu_custom_call.1} parent=1 // pred_check_branch
      %57 = sbr.rel (0) target = $region29
    $region28: #{tpu_custom_call.1} parent=1 // pred_region
      %58 = dma.done [#allocation7], 512
    $region29: #{tpu_custom_call.1} parent=1 // pred_fallthru
      _
    // Predicated region
    $region30: #{tpu_custom_call.1} parent=1 // pred_check
      _
    $region31: #{tpu_custom_call.1} parent=1 // pred_check_branch
      %60 = sbr.rel (0) target = $region33
    $region32: #{tpu_custom_call.1} parent=1 // pred_region
      %61 = dma.done [#allocation7], 2048
    $region33: #{tpu_custom_call.1} parent=1 // pred_fallthru
      _
    %p62 = scmp.eq.s32.totalorder 0, 0
    // Predicated region
    $region34: #{tpu_custom_call.1} parent=1 // pred_check
      %p63 = pneg %p62
    $region35: #{tpu_custom_call.1} parent=1 // pred_check_branch
      %65 = sbr.rel (%p63) target = $region37
    $region36: #{tpu_custom_call.1} parent=1 // pred_region
      %66 = vst [vmem:[#allocation2] sm:$0xff] 0.0
    $region37: #{tpu_custom_call.1} parent=1 // pred_fallthru
      _
    %v67 = vld [vmem:[#allocation3] sm:$0xff]
    %v68 = vld [vmem:[#allocation3 + $0x8] sm:$0xff]
    %v69 = vld [vmem:[#allocation3 + $0x10] sm:$0xff]
    %v70 = vld [vmem:[#allocation3 + $0x18] sm:$0xff]
    %v71 = vld [vmem:[#allocation3 + $0x20] sm:$0xff]
    %v72 = vld [vmem:[#allocation3 + $0x28] sm:$0xff]
    %v73 = vld [vmem:[#allocation3 + $0x30] sm:$0xff]
    %v74 = vld [vmem:[#allocation3 + $0x38] sm:$0xff]
    %v75 = vld [vmem:[#allocation6] sm:$0xff]
    %v76 = vld [vmem:[#allocation6 + $0x8] sm:$0xff]
    %v77 = vld [vmem:[#allocation6 + $0x10] sm:$0xff]
    %v78 = vld [vmem:[#allocation6 + $0x18] sm:$0xff]
    %v79 = vld [vmem:[%s2] sm:$0x1]
    %v81 = vlaneseq
    %v82 = vshrl.u32 %v81, 7
    %v83 = vsub.s32 0, %v82
    %v84 = vrot.slane %v79, %v83
    %vm86 = vcmask 261120
    %v88 = vsel %vm86, %v67, 0
    %v91 = vsel %vm86, %v68, 0
    %v94 = vsel %vm86, %v69, 0
    %v97 = vsel %vm86, %v70, 0
    %v100 = vsel %vm86, %v71, 0
    %v103 = vsel %vm86, %v72, 0
    %v106 = vsel %vm86, %v73, 0
    %v109 = vsel %vm86, %v74, 0
    %111 = vmatprep.subr.mxu0 0.0
    %112 = vmatpush1.msra.mxu0 0.0
    %113 = vmatprep.subr.mxu0 0.0
    %114 = vmatpush1.msra.mxu0 0.0
    %115 = vmatprep.subr.mxu0 0.0
    %116 = vmatpush1.msra.mxu0 0.0
    %117 = vmatprep.subr.mxu0 0.0
    %118 = vmatpush1.msra.mxu0 0.0
    %119 = vmatprep.subr.mxu0 0.0
    %120 = vmatpush1.msra.mxu0 0.0
    %121 = vmatprep.subr.mxu0 0.0
    %122 = vmatpush1.msra.mxu0 0.0
    %123 = vmatprep.subr.mxu0 0.0
    %124 = vmatpush1.msra.mxu0 0.0
    %125 = vmatprep.subr.mxu0 0.0
    %126 = vmatpush1.msra.mxu0 0.0
    %127 = vmatprep.subr.mxu0 0.0
    %128 = vmatpush1.msra.mxu0 0.0
    %129 = vmatprep.subr.mxu0 0.0
    %130 = vmatpush1.msra.mxu0 0.0
    %131 = vmatprep.subr.mxu0 0.0
    %132 = vmatpush1.msra.mxu0 0.0
    %133 = vmatprep.subr.mxu0 0.0
    %134 = vmatpush1.msra.mxu0 0.0
    %135 = vmatprep.subr.mxu0 0.0
    %136 = vmatpush1.msra.mxu0 %v78
    %137 = vmatprep.subr.mxu0 0.0
    %138 = vmatpush1.msra.mxu0 %v77
    %139 = vmatprep.subr.mxu0 0.0
    %140 = vmatpush1.msra.mxu0 %v76
    %141 = vmatprep.subr.mxu0 0.0
    %142 = vmatpush1.msra.mxu0 %v75
    %143 = vmatprep.subr.mxu0 0.0
    %144 = vmatpush2.msra.mxu0 0.0
    %145 = vmatprep.subr.mxu0 0.0
    %146 = vmatpush2.msra.mxu0 0.0
    %147 = vmatprep.subr.mxu0 0.0
    %148 = vmatpush2.msra.mxu0 0.0
    %149 = vmatprep.subr.mxu0 0.0
    %150 = vmatpush2.msra.mxu0 0.0
    %151 = vmatprep.subr.mxu0 0.0
    %152 = vmatpush2.msra.mxu0 0.0
    %153 = vmatprep.subr.mxu0 0.0
    %154 = vmatpush2.msra.mxu0 0.0
    %155 = vmatprep.subr.mxu0 0.0
    %156 = vmatpush2.msra.mxu0 0.0
    %157 = vmatprep.subr.mxu0 0.0
    %158 = vmatpush2.msra.mxu0 0.0
    %159 = vmatprep.subr.mxu0 0.0
    %160 = vmatpush2.msra.mxu0 0.0
    %161 = vmatprep.subr.mxu0 0.0
    %162 = vmatpush2.msra.mxu0 0.0
    %163 = vmatprep.subr.mxu0 0.0
    %164 = vmatpush2.msra.mxu0 0.0
    %165 = vmatprep.subr.mxu0 0.0
    %166 = vmatpush2.msra.mxu0 0.0
    %167 = vmatprep.subr.mxu0 0.0
    %168 = vmatpush2.msra.mxu0 0.0
    %169 = vmatprep.subr.mxu0 0.0
    %170 = vmatpush2.msra.mxu0 0.0
    %171 = vmatprep.subr.mxu0 0.0
    %172 = vmatpush2.msra.mxu0 0.0
    %173 = vmatprep.subr.mxu0 0.0
    %174 = vmatpush2.msra.mxu0 0.0
    %175 = vmatprep.mubr.f32.mxu0 0.0
    %176 = vmatmul.mubr.f32.gmra.mxu0 %v88
    %v177 = vpop.f32.mrf.mxu0
    %v178 = vadd.f32 %v84, %v177
    %v179 = vpop.f32.mrf.mxu0
    %180 = vmatprep.mubr.f32.mxu0 0.0
    %181 = vmatmul.mubr.f32.gmra.mxu0 %v91
    %v182 = vpop.f32.mrf.mxu0
    %v183 = vadd.f32 %v84, %v182
    %v184 = vpop.f32.mrf.mxu0
    %185 = vmatprep.mubr.f32.mxu0 0.0
    %186 = vmatmul.mubr.f32.gmra.mxu0 %v94
    %v187 = vpop.f32.mrf.mxu0
    %v188 = vadd.f32 %v84, %v187
    %v189 = vpop.f32.mrf.mxu0
    %190 = vmatprep.mubr.f32.mxu0 0.0
    %191 = vmatmul.mubr.f32.gmra.mxu0 %v97
    %v192 = vpop.f32.mrf.mxu0
    %v193 = vadd.f32 %v84, %v192
    %v194 = vpop.f32.mrf.mxu0
    %195 = vmatprep.mubr.f32.mxu0 0.0
    %196 = vmatmul.mubr.f32.gmra.mxu0 %v100
    %v197 = vpop.f32.mrf.mxu0
    %v198 = vadd.f32 %v84, %v197
    %v199 = vpop.f32.mrf.mxu0
    %200 = vmatprep.mubr.f32.mxu0 0.0
    %201 = vmatmul.mubr.f32.gmra.mxu0 %v103
    %v202 = vpop.f32.mrf.mxu0
    %v203 = vadd.f32 %v84, %v202
    %v204 = vpop.f32.mrf.mxu0
    %205 = vmatprep.mubr.f32.mxu0 0.0
    %206 = vmatmul.mubr.f32.gmra.mxu0 %v106
    %v207 = vpop.f32.mrf.mxu0
    %v208 = vadd.f32 %v84, %v207
    %v209 = vpop.f32.mrf.mxu0
    %210 = vmatprep.mubr.f32.mxu0 0.0
    %211 = vmatmul.mubr.f32.gmra.mxu0 %v109
    %v212 = vpop.f32.mrf.mxu0
    %v213 = vadd.f32 %v84, %v212
    %v214 = vpop.f32.mrf.mxu0
    %215 = vdwg.mxu0
    %v216 = vmax.f32 %v178, 0.0
    %v217 = vmax.f32 %v183, 0.0
    %v218 = vmax.f32 %v188, 0.0
    %v219 = vmax.f32 %v193, 0.0
    %v220 = vmax.f32 %v198, 0.0
    %v221 = vmax.f32 %v203, 0.0
    %v222 = vmax.f32 %v208, 0.0
    %v223 = vmax.f32 %v213, 0.0
    %v224 = vld [vmem:[#allocation2] sm:$0xff]
    %v225 = vrot.slane %v216, 4
    %v226 = vadd.f32 %v216, %v225
    %v227 = vrot.slane %v226, 2
    %v228 = vadd.f32 %v226, %v227
    %v229 = vrot.slane %v228, 1
    %v230 = vadd.f32 %v228, %v229
    %v231 = vrot.slane %v217, 4
    %v232 = vadd.f32 %v217, %v231
    %v233 = vrot.slane %v232, 2
    %v234 = vadd.f32 %v232, %v233
    %v235 = vrot.slane %v234, 1
    %v236 = vadd.f32 %v234, %v235
    %v237 = vrot.slane %v218, 4
    %v238 = vadd.f32 %v218, %v237
    %v239 = vrot.slane %v238, 2
    %v240 = vadd.f32 %v238, %v239
    %v241 = vrot.slane %v240, 1
    %v242 = vadd.f32 %v240, %v241
    %v243 = vrot.slane %v219, 4
    %v244 = vadd.f32 %v219, %v243
    %v245 = vrot.slane %v244, 2
    %v246 = vadd.f32 %v244, %v245
    %v247 = vrot.slane %v246, 1
    %v248 = vadd.f32 %v246, %v247
    %v249 = vrot.slane %v220, 4
    %v250 = vadd.f32 %v220, %v249
    %v251 = vrot.slane %v250, 2
    %v252 = vadd.f32 %v250, %v251
    %v253 = vrot.slane %v252, 1
    %v254 = vadd.f32 %v252, %v253
    %v255 = vrot.slane %v221, 4
    %v256 = vadd.f32 %v221, %v255
    %v257 = vrot.slane %v256, 2
    %v258 = vadd.f32 %v256, %v257
    %v259 = vrot.slane %v258, 1
    %v260 = vadd.f32 %v258, %v259
    %v261 = vrot.slane %v222, 4
    %v262 = vadd.f32 %v222, %v261
    %v263 = vrot.slane %v262, 2
    %v264 = vadd.f32 %v262, %v263
    %v265 = vrot.slane %v264, 1
    %v266 = vadd.f32 %v264, %v265
    %v267 = vrot.slane %v223, 4
    %v268 = vadd.f32 %v223, %v267
    %v269 = vrot.slane %v268, 2
    %v270 = vadd.f32 %v268, %v269
    %v271 = vrot.slane %v270, 1
    %v272 = vadd.f32 %v270, %v271
    %vm281 = vcmask 1041409
    %v282 = vsel %vm281, %v236, %v230
    %vm283 = vcmask 1042434
    %v284 = vsel %vm283, %v242, %v282
    %vm285 = vcmask 1043459
    %v286 = vsel %vm285, %v248, %v284
    %vm287 = vcmask 1044484
    %v288 = vsel %vm287, %v254, %v286
    %vm289 = vcmask 1045509
    %v290 = vsel %vm289, %v260, %v288
    %vm291 = vcmask 1046534
    %v292 = vsel %vm291, %v266, %v290
    %vm293 = vcmask 1047559
    %v294 = vsel %vm293, %v272, %v292
    %v296 = vadd.f32 %v224, %v294
    %297 = vst [vmem:[#allocation2] sm:$0xff] %v296
    // Predicated region
    $region38: #{tpu_custom_call.1} parent=1 // pred_check
      %p298 = pneg %p62
    $region39: #{tpu_custom_call.1} parent=1 // pred_check_branch
      %300 = sbr.rel (%p298) target = $region41
    $region40: #{tpu_custom_call.1} parent=1 // pred_region
      %v301 = vld [vmem:[#allocation2] sm:$0xff]
      %v302 = vld [vmem:[#allocation8] sm:$0xff]
      %v303 = vld [vmem:[#allocation8 + $0x8] sm:$0xff]
      %v304 = vld [vmem:[#allocation8 + $0x10] sm:$0xff]
      %v305 = vld [vmem:[#allocation8 + $0x18] sm:$0xff]
      %v306 = vld [vmem:[#allocation8 + $0x20] sm:$0xff]
      %v307 = vld [vmem:[#allocation8 + $0x28] sm:$0xff]
      %v308 = vld [vmem:[#allocation8 + $0x30] sm:$0xff]
      %v309 = vld [vmem:[#allocation8 + $0x38] sm:$0xff]
      %v310 = vld [vmem:[#allocation8 + $0x40] sm:$0xff]
      %v311 = vld [vmem:[#allocation8 + $0x48] sm:$0xff]
      %v312 = vld [vmem:[#allocation8 + $0x50] sm:$0xff]
      %v313 = vld [vmem:[#allocation8 + $0x58] sm:$0xff]
      %v314 = vld [vmem:[#allocation8 + $0x60] sm:$0xff]
      %v315 = vld [vmem:[#allocation8 + $0x68] sm:$0xff]
      %v316 = vld [vmem:[#allocation8 + $0x70] sm:$0xff]
      %v317 = vld [vmem:[#allocation8 + $0x78] sm:$0xff]
      %v318 = vld [vmem:[%s4] sm:$0x1]
      %v320 = vlaneseq
      %v321 = vshrl.u32 %v320, 7
      %v322 = vsub.s32 0, %v321
      %v323 = vrot.slane %v318, %v322
      %325 = vmatprep.subr.mxu0 0.0
      %326 = vmatpush1.msra.mxu0 %v317
      %327 = vmatprep.subr.mxu0 0.0
      %328 = vmatpush1.msra.mxu0 %v316
      %329 = vmatprep.subr.mxu0 0.0
      %330 = vmatpush1.msra.mxu0 %v315
      %331 = vmatprep.subr.mxu0 0.0
      %332 = vmatpush1.msra.mxu0 %v314
      %333 = vmatprep.subr.mxu0 0.0
      %334 = vmatpush1.msra.mxu0 %v313
      %335 = vmatprep.subr.mxu0 0.0
      %336 = vmatpush1.msra.mxu0 %v312
      %337 = vmatprep.subr.mxu0 0.0
      %338 = vmatpush1.msra.mxu0 %v311
      %339 = vmatprep.subr.mxu0 0.0
      %340 = vmatpush1.msra.mxu0 %v310
      %341 = vmatprep.subr.mxu0 0.0
      %342 = vmatpush1.msra.mxu0 %v309
      %343 = vmatprep.subr.mxu0 0.0
      %344 = vmatpush1.msra.mxu0 %v308
      %345 = vmatprep.subr.mxu0 0.0
      %346 = vmatpush1.msra.mxu0 %v307
      %347 = vmatprep.subr.mxu0 0.0
      %348 = vmatpush1.msra.mxu0 %v306
      %349 = vmatprep.subr.mxu0 0.0
      %350 = vmatpush1.msra.mxu0 %v305
      %351 = vmatprep.subr.mxu0 0.0
      %352 = vmatpush1.msra.mxu0 %v304
      %353 = vmatprep.subr.mxu0 0.0
      %354 = vmatpush1.msra.mxu0 %v303
      %355 = vmatprep.subr.mxu0 0.0
      %356 = vmatpush1.msra.mxu0 %v302
      %357 = vmatprep.subr.mxu0 0.0
      %358 = vmatpush2.msra.mxu0 0.0
      %359 = vmatprep.subr.mxu0 0.0
      %360 = vmatpush2.msra.mxu0 0.0
      %361 = vmatprep.subr.mxu0 0.0
      %362 = vmatpush2.msra.mxu0 0.0
      %363 = vmatprep.subr.mxu0 0.0
      %364 = vmatpush2.msra.mxu0 0.0
      %365 = vmatprep.subr.mxu0 0.0
      %366 = vmatpush2.msra.mxu0 0.0
      %367 = vmatprep.subr.mxu0 0.0
      %368 = vmatpush2.msra.mxu0 0.0
      %369 = vmatprep.subr.mxu0 0.0
      %370 = vmatpush2.msra.mxu0 0.0
      %371 = vmatprep.subr.mxu0 0.0
      %372 = vmatpush2.msra.mxu0 0.0
      %373 = vmatprep.subr.mxu0 0.0
      %374 = vmatpush2.msra.mxu0 0.0
      %375 = vmatprep.subr.mxu0 0.0
      %376 = vmatpush2.msra.mxu0 0.0
      %377 = vmatprep.subr.mxu0 0.0
      %378 = vmatpush2.msra.mxu0 0.0
      %379 = vmatprep.subr.mxu0 0.0
      %380 = vmatpush2.msra.mxu0 0.0
      %381 = vmatprep.subr.mxu0 0.0
      %382 = vmatpush2.msra.mxu0 0.0
      %383 = vmatprep.subr.mxu0 0.0
      %384 = vmatpush2.msra.mxu0 0.0
      %385 = vmatprep.subr.mxu0 0.0
      %386 = vmatpush2.msra.mxu0 0.0
      %387 = vmatprep.subr.mxu0 0.0
      %388 = vmatpush2.msra.mxu0 0.0
      %389 = vmatprep.mubr.f32.mxu0 0.0
      %390 = vmatmul.mubr.f32.gmra.mxu0 %v301
      %v391 = vpop.f32.mrf.mxu0
      %v392 = vadd.f32 %v323, %v391
      %v393 = vpop.f32.mrf.mxu0
      %394 = vdwg.mxu0
      %395 = vst [vmem:[#allocation9] sm:$0xff] %v392
    $region41: #{tpu_custom_call.1} parent=1 // pred_fallthru
      _
    // Predicated region
    $region42: #{tpu_custom_call.1} parent=1 // pred_check
      _
    $region43: #{tpu_custom_call.1} parent=1 // pred_check_branch
      %397 = sbr.rel (0) target = $region45
    $region44: #{tpu_custom_call.1} parent=1 // pred_region
      %s399 = ssub.s32 128, 128
      %400 = vsyncadd [#allocation5], %s399
      %s402 = sshll.u32 [#allocation9], 4
      %s403 = int_to_ptr.vmem [resolvable:$true] %s402
      %405 = dma.vmem_to_hbm [thread:$0]  %s403, 128, %s5, [#allocation5]
    $region45: #{tpu_custom_call.1} parent=1 // pred_fallthru
      _
    // Predicated region
    $region46: #{tpu_custom_call.1} parent=1 // pred_check
      _
    $region47: #{tpu_custom_call.1} parent=1 // pred_check_branch
      %407 = sbr.rel (0) target = $region49
    $region48: #{tpu_custom_call.1} parent=1 // pred_region
      %408 = dma.done [#allocation5], 128
    $region49: #{tpu_custom_call.1} parent=1 // pred_fallthru
      _
    %409 = vsyncpa [#allocation4], 1
    %410 = vsyncpa [#allocation7], 1
    %411 = vsyncpa [#allocation5], 1

</llo_original>
